<compile_context>
chip_gen: v6e
topology: v6e:2x2x1
jax: 0.10.0
libtpu: 0.0.40
codegen_flags: <defaults>
</compile_context>

<pallas_src>
import functools

import numpy as np
import jax
import jax.numpy as jnp
from jax.experimental import pallas as pl
from jax.experimental.pallas import tpu as pltpu


def _dino_loss_kernel(inv_temp_ref, student_ref, teacher_ref, center_ref,
                      loss_ref, new_center_ref,
                      loss_acc_ref, center_acc_ref, *,
                      ncrops, ncrops_t, total_batch, student_temp,
                      center_momentum, n_loss_terms):
    pid = pl.program_id(0)
    nsteps = pl.num_programs(0)

    @pl.when(pid == 0)
    def _init():
        loss_acc_ref[...] = jnp.zeros_like(loss_acc_ref)
        center_acc_ref[...] = jnp.zeros_like(center_acc_ref)

    inv_temp = inv_temp_ref[0, 0]                      # precomputed 1/temp
    inv_student_temp = np.float32(1.0 / student_temp)  # Python constant, baked in

    # Load this batch tile; keep all on-chip math in f32.
    s = student_ref[...].astype(jnp.float32) * inv_student_temp  # (ncrops, TB, D)
    t = teacher_ref[...].astype(jnp.float32)                     # (ncrops_t, TB, D)
    c = center_ref[...].astype(jnp.float32)                      # (1, D)

    # ---- teacher: softmax((t - center) * inv_temp, axis=-1) ----
    tl = (t - c) * inv_temp
    tl = tl - jnp.max(tl, axis=-1, keepdims=True)
    te = jnp.exp(tl)
    # exact per-row reciprocal (only ncrops_t*TB of them), then broadcast mul:
    # no per-element divides, no approx error in q.
    q = te * (1.0 / jnp.sum(te, axis=-1, keepdims=True))

    # ---- student: log_softmax(s, axis=-1) ----
    sl = s - jnp.max(s, axis=-1, keepdims=True)
    logz = jnp.log(jnp.sum(jnp.exp(sl), axis=-1, keepdims=True))
    ls = sl - logz                                               # (ncrops, TB, D)

    # ---- cross-entropy, factored over student crops ----
    # sum_{v != iq} sum(-q_iq * ls_v) = -sum(q_iq * (S - ls_iq)),  S = sum_v ls_v
    S = jnp.sum(ls, axis=0)                                      # (TB, D)
    block_total = jnp.float32(0.0)
    for iq in range(ncrops_t):                                   # static, small
        rest = S - ls[iq] if iq < ncrops else S
        block_total = block_total - jnp.sum(q[iq] * rest)        # single reduce
    loss_acc_ref[...] = loss_acc_ref[...] + block_total

    # ---- center EMA numerator: sum of RAW teacher rows in this tile ----
    center_acc_ref[...] = center_acc_ref[...] + jnp.sum(
        jnp.sum(t, axis=0), axis=0, keepdims=True)               # (1, D)

    @pl.when(pid == nsteps - 1)
    def _finalize():
        inv_scale = np.float32(1.0 / (total_batch * n_loss_terms))
        loss_ref[...] = (loss_acc_ref[...] * inv_scale).astype(loss_ref.dtype)
        batch_center = center_acc_ref[...] * np.float32(
            1.0 / (ncrops_t * total_batch))
        new_center_ref[...] = (c * np.float32(center_momentum)
                               + batch_center * np.float32(1.0 - center_momentum)
                               ).astype(new_center_ref.dtype)


def _pick_batch_tile(batch, row_bytes, sublane=8, budget_bytes=16 * 1024 * 1024):
    """Largest batch tile (multiple of `sublane`, dividing batch) whose
    double-buffered student+teacher tiles fit the VMEM budget."""
    if batch % sublane != 0:
        return batch  # single full-batch block (full-dim rule covers alignment)
    candidates = [tb for tb in range(sublane, batch + 1, sublane)
                  if batch % tb == 0]
    fitting = [tb for tb in candidates if 2 * tb * row_bytes <= budget_bytes]
    return max(fitting) if fitting else min(candidates)


class DINOLoss:
    """JAX/Pallas port of the PyTorch DINOLoss module (forward + center EMA)."""

    def __init__(self, out_dim, ncrops, ncrops_t=1, warmup_teacher_temp=0.04,
                 teacher_temp=0.04, warmup_teacher_temp_epochs=0, nepochs=20,
                 student_temp=0.1, center_momentum=0.9):
        self.student_temp = student_temp
        self.center_momentum = center_momentum
        self.ncrops = ncrops
        self.ncrops_t = ncrops_t
        self.out_dim = out_dim
        # buffer 'center' initialized to zeros, same as PyTorch register_buffer.
        self.center = jnp.zeros((1, out_dim), jnp.float32)
        self.teacher_temp_schedule = np.concatenate((
            np.linspace(warmup_teacher_temp, teacher_temp,
                        warmup_teacher_temp_epochs),
            np.ones(nepochs - warmup_teacher_temp_epochs) * teacher_temp))

    def __call__(self, student_output, teacher_output, epoch):
        n_rows_s, d = student_output.shape
        assert n_rows_s % self.ncrops == 0
        batch = n_rows_s // self.ncrops
        assert teacher_output.shape == (self.ncrops_t * batch, d)
        n_loss_terms = self.ncrops_t * self.ncrops - min(self.ncrops_t, self.ncrops)
        assert n_loss_terms > 0

        # Teacher / center path is no-grad in the PyTorch reference.
        teacher_output = jax.lax.stop_gradient(teacher_output)
        # TODO(synk): define a custom_vjp if this loss must be differentiated
        # through pallas_call (this implements the forward pass only).

        # Leading-axis crop layout: per-crop indexing is free, no relayout copies.
        student3 = student_output.reshape(self.ncrops, batch, d)
        teacher3 = teacher_output.reshape(self.ncrops_t, batch, d)

        sublane = 8 if student3.dtype.itemsize == 4 else 16
        row_bytes = (self.ncrops * student3.dtype.itemsize
                     + self.ncrops_t * teacher3.dtype.itemsize) * d
        tb = _pick_batch_tile(batch, row_bytes, sublane=sublane)
        grid = (batch // tb,)
        # TODO(synk): for DINO-sized out_dim (65536) with many crops, a single
        # batch row no longer fits VMEM; that needs a D-tiled online softmax.

        inv_temp = jnp.asarray(
            1.0 / float(self.teacher_temp_schedule[epoch]),
            dtype=jnp.float32).reshape(1, 1)

        kernel = functools.partial(
            _dino_loss_kernel,
            ncrops=self.ncrops, ncrops_t=self.ncrops_t, total_batch=batch,
            student_temp=self.student_temp,
            center_momentum=self.center_momentum, n_loss_terms=n_loss_terms)

        loss, new_center = pl.pallas_call(
            kernel,
            grid=grid,
            out_shape=(jax.ShapeDtypeStruct((1, 1), jnp.float32),   # scalar loss
                       jax.ShapeDtypeStruct((1, d), jnp.float32)),  # new center
            in_specs=[
                pl.BlockSpec(memory_space=pltpu.MemorySpace.SMEM),  # 1/temp (1,1)
                pl.BlockSpec((self.ncrops, tb, d), lambda i: (0, i, 0)),
                pl.BlockSpec((self.ncrops_t, tb, d), lambda i: (0, i, 0)),
                pl.BlockSpec((1, d), lambda i: (0, 0)),             # center
            ],
            out_specs=(
                pl.BlockSpec((1, 1), lambda i: (0, 0)),
                pl.BlockSpec((1, d), lambda i: (0, 0)),
            ),
            scratch_shapes=[
                pltpu.VMEM((1, 1), jnp.float32),   # loss accumulator
                pltpu.VMEM((1, d), jnp.float32),   # teacher-sum accumulator
            ],
            compiler_params=pltpu.CompilerParams(
                dimension_semantics=("arbitrary",),   # reduction over batch tiles
                vmem_limit_bytes=48 * 1024 * 1024,    # headroom; < v7x 64 MiB phys
            ),
        )(inv_temp, student3, teacher3, self.center)

        # TODO(synk): multi-device data-parallel needs an all-reduce of the
        # teacher batch sum (PyTorch dist.all_reduce) before the EMA.
        # TODO(synk): center is Python-object state; thread it functionally
        # under jit/scan instead of mutating self.center.
        self.center = new_center
        return loss[0, 0]


def _dino_loss_ref(student, teacher, center, temp, ncrops, ncrops_t,
                   student_temp, center_momentum):
    """Pure-JAX reference matching the PyTorch module (forward + EMA)."""
    n_rows, d = student.shape
    batch = n_rows // ncrops
    s = (student / student_temp).reshape(ncrops, batch, d)
    ls = jax.nn.log_softmax(s, axis=-1)
    q = jax.nn.softmax((teacher - center) / temp, axis=-1).reshape(
        ncrops_t, batch, d)
    total, n = 0.0, 0
    for iq in range(ncrops_t):
        for v in range(ncrops):
            if v == iq:
                continue
            total = total + jnp.mean(jnp.sum(-q[iq] * ls[v], axis=-1))
            n += 1
    total = total / n
    bc = jnp.sum(teacher, axis=0, keepdims=True) / teacher.shape[0]
    new_center = center * center_momentum + bc * (1.0 - center_momentum)
    return total, new_center


if __name__ == "__main__":
    out_dim, ncrops, ncrops_t, batch = 128, 4, 2, 8

    key = jax.random.PRNGKey(0)
    k1, k2 = jax.random.split(key)
    student = jax.random.normal(k1, (ncrops * batch, out_dim), dtype=jnp.float32)
    teacher = jax.random.normal(k2, (ncrops_t * batch, out_dim), dtype=jnp.float32)

    dino = DINOLoss(out_dim, ncrops, ncrops_t=ncrops_t)
    loss = dino(student, teacher, epoch=0)
    jax.block_until_ready(loss)
    jax.block_until_ready(dino.center)

    # Pure-JAX reference check (same inputs, fresh zero center).
    ref_loss, ref_center = _dino_loss_ref(
        student, teacher, jnp.zeros((1, out_dim), jnp.float32),
        float(dino.teacher_temp_schedule[0]), ncrops, ncrops_t,
        dino.student_temp, dino.center_momentum)
    np.testing.assert_allclose(np.asarray(loss), np.asarray(ref_loss),
                               rtol=1e-4, atol=1e-4)
    np.testing.assert_allclose(np.asarray(dino.center), np.asarray(ref_center),
                               rtol=1e-4, atol=1e-5)

    print("KERNEL_OK")
</pallas_src>

<mosaic_0001>
module attributes {stable_mosaic.version = 11 : i64} {
  func.func @_dino_loss_kernel(%arg0: i32, %arg1: memref<1x1xf32, #tpu.memory_space<smem>>, %arg2: memref<4x8x128xf32, #tpu.memory_space<vmem>>, %arg3: memref<2x8x128xf32, #tpu.memory_space<vmem>>, %arg4: memref<1x128xf32, #tpu.memory_space<vmem>>, %arg5: memref<1x1xf32, #tpu.memory_space<vmem>>, %arg6: memref<1x128xf32, #tpu.memory_space<vmem>>, %arg7: memref<1x1xf32, #tpu.memory_space<vmem>>, %arg8: memref<1x128xf32, #tpu.memory_space<vmem>>) attributes {dimension_semantics = [#tpu.dimension_semantics<arbitrary>], iteration_bounds = array<i64: 1>, scalar_prefetch = 0 : i64, scratch_operands = 2 : i64, tpu.core_type = #tpu.core_type<tc>, window_params = [{transform_indices = @transform_0, window_bounds = array<i64: 1, 1>}, {transform_indices = @transform_1, window_bounds = array<i64: 4, 8, 128>}, {transform_indices = @transform_2, window_bounds = array<i64: 2, 8, 128>}, {pipeline_mode = #tpu.pipeline_mode<synchronous>, transform_indices = @transform_3, window_bounds = array<i64: 1, 128>}, {pipeline_mode = #tpu.pipeline_mode<synchronous>, transform_indices = @transform_4, window_bounds = array<i64: 1, 1>}, {pipeline_mode = #tpu.pipeline_mode<synchronous>, transform_indices = @transform_5, window_bounds = array<i64: 1, 128>}]} {
    %c0_i32 = arith.constant 0 : i32
    %0 = arith.cmpi eq, %arg0, %c0_i32 : i32
    %1 = arith.extui %0 : i1 to i32
    %c0_i32_0 = arith.constant 0 : i32
    %2 = arith.cmpi ne, %1, %c0_i32_0 : i32
    scf.if %2 {
      %cst_31 = arith.constant 0.000000e+00 : f32
      %71 = vector.broadcast %cst_31 : f32 to vector<1x1xf32>
      %c0_32 = arith.constant 0 : index
      %c0_33 = arith.constant 0 : index
      %72 = vector.load %arg7[%c0_32, %c0_33] : memref<1x1xf32, #tpu.memory_space<vmem>>, vector<1x1xf32>
      tpu.vector_store %arg7[%c0_32, %c0_33], %71 {strides = array<i32>} : memref<1x1xf32, #tpu.memory_space<vmem>>, vector<1x1xf32>,
      %cst_34 = arith.constant 0.000000e+00 : f32
      %73 = vector.broadcast %cst_34 : f32 to vector<1x128xf32>
      %c0_35 = arith.constant 0 : index
      %c0_36 = arith.constant 0 : index
      %74 = vector.load %arg8[%c0_35, %c0_36] : memref<1x128xf32, #tpu.memory_space<vmem>>, vector<1x128xf32>
      tpu.vector_store %arg8[%c0_35, %c0_36], %73 {strides = array<i32>} : memref<1x128xf32, #tpu.memory_space<vmem>>, vector<1x128xf32>,
    } else {
    }
    %c0 = arith.constant 0 : index
    %c0_1 = arith.constant 0 : index
    %3 = memref.load %arg1[%c0, %c0_1] : memref<1x1xf32, #tpu.memory_space<smem>>
    %c0_2 = arith.constant 0 : index
    %c0_3 = arith.constant 0 : index
    %c0_4 = arith.constant 0 : index
    %4 = vector.load %arg2[%c0_2, %c0_3, %c0_4] : memref<4x8x128xf32, #tpu.memory_space<vmem>>, vector<4x8x128xf32>
    %cst = arith.constant 1.000000e+01 : f32
    %5 = vector.broadcast %cst : f32 to vector<4x8x128xf32>
    %6 = arith.mulf %4, %5 : vector<4x8x128xf32>
    %c0_5 = arith.constant 0 : index
    %c0_6 = arith.constant 0 : index
    %c0_7 = arith.constant 0 : index
    %7 = vector.load %arg3[%c0_5, %c0_6, %c0_7] : memref<2x8x128xf32, #tpu.memory_space<vmem>>, vector<2x8x128xf32>
    %c0_8 = arith.constant 0 : index
    %c0_9 = arith.constant 0 : index
    %8 = vector.load %arg4[%c0_8, %c0_9] : memref<1x128xf32, #tpu.memory_space<vmem>>, vector<1x128xf32>
    %9 = vector.shape_cast %8 : vector<1x128xf32> to vector<1x1x128xf32>
    %10 = vector.broadcast %9 : vector<1x1x128xf32> to vector<2x8x128xf32>
    %11 = arith.subf %7, %10 : vector<2x8x128xf32>
    %12 = vector.broadcast %3 : f32 to vector<2x8x128xf32>
    %13 = arith.mulf %11, %12 : vector<2x8x128xf32>
    %cst_10 = arith.constant dense<0xFF800000> : vector<2x8xf32>
    %14 = vector.multi_reduction <maximumf>, %13, %cst_10 [2] : vector<2x8x128xf32> to vector<2x8xf32>
    %15 = vector.shape_cast %14 : vector<2x8xf32> to vector<2x8x1xf32>
    %16 = vector.broadcast %15 : vector<2x8x1xf32> to vector<2x8x128xf32>
    %17 = arith.subf %13, %16 : vector<2x8x128xf32>
    %18 = math.exp %17 : vector<2x8x128xf32>
    %cst_11 = arith.constant dense<0.000000e+00> : vector<2x8xf32>
    %19 = vector.multi_reduction <add>, %18, %cst_11 [2] : vector<2x8x128xf32> to vector<2x8xf32>
    %20 = vector.shape_cast %19 : vector<2x8xf32> to vector<2x8x1xf32>
    %cst_12 = arith.constant 1.000000e+00 : f32
    %21 = vector.broadcast %cst_12 : f32 to vector<2x8x1xf32>
    %22 = arith.divf %21, %20 : vector<2x8x1xf32>
    %23 = vector.broadcast %22 : vector<2x8x1xf32> to vector<2x8x128xf32>
    %24 = arith.mulf %18, %23 : vector<2x8x128xf32>
    %cst_13 = arith.constant dense<0xFF800000> : vector<4x8xf32>
    %25 = vector.multi_reduction <maximumf>, %6, %cst_13 [2] : vector<4x8x128xf32> to vector<4x8xf32>
    %26 = vector.shape_cast %25 : vector<4x8xf32> to vector<4x8x1xf32>
    %27 = vector.broadcast %26 : vector<4x8x1xf32> to vector<4x8x128xf32>
    %28 = arith.subf %6, %27 : vector<4x8x128xf32>
    %29 = math.exp %28 : vector<4x8x128xf32>
    %cst_14 = arith.constant dense<0.000000e+00> : vector<4x8xf32>
    %30 = vector.multi_reduction <add>, %29, %cst_14 [2] : vector<4x8x128xf32> to vector<4x8xf32>
    %31 = vector.shape_cast %30 : vector<4x8xf32> to vector<4x8x1xf32>
    %32 = math.log %31 : vector<4x8x1xf32>
    %33 = vector.broadcast %32 : vector<4x8x1xf32> to vector<4x8x128xf32>
    %34 = arith.subf %28, %33 : vector<4x8x128xf32>
    %cst_15 = arith.constant dense<0.000000e+00> : vector<8x128xf32>
    %35 = vector.multi_reduction <add>, %34, %cst_15 [0] : vector<4x8x128xf32> to vector<8x128xf32>
    %36 = vector.extract_strided_slice %34 {offsets = [0, 0, 0], sizes = [1, 8, 128], strides = [1, 1, 1]} : vector<4x8x128xf32> to vector<1x8x128xf32>
    %37 = vector.shape_cast %36 : vector<1x8x128xf32> to vector<8x128xf32>
    %38 = arith.subf %35, %37 : vector<8x128xf32>
    %39 = vector.extract_strided_slice %24 {offsets = [0, 0, 0], sizes = [1, 8, 128], strides = [1, 1, 1]} : vector<2x8x128xf32> to vector<1x8x128xf32>
    %40 = vector.shape_cast %39 : vector<1x8x128xf32> to vector<8x128xf32>
    %41 = arith.mulf %40, %38 : vector<8x128xf32>
    %42 = vector.shape_cast %41 : vector<8x128xf32> to vector<1x8x128xf32>
    %cst_16 = arith.constant dense<0.000000e+00> : vector<1xf32>
    %43 = vector.multi_reduction <add>, %42, %cst_16 [1, 2] : vector<1x8x128xf32> to vector<1xf32>
    %44 = vector.shape_cast %43 : vector<1xf32> to vector<1x1x1xf32>
    %45 = vector.extract %44[0, 0, 0] : f32 from vector<1x1x1xf32>
    %cst_17 = arith.constant 0.000000e+00 : f32
    %46 = arith.subf %cst_17, %45 : f32
    %47 = vector.extract_strided_slice %34 {offsets = [1, 0, 0], sizes = [1, 8, 128], strides = [1, 1, 1]} : vector<4x8x128xf32> to vector<1x8x128xf32>
    %48 = vector.shape_cast %47 : vector<1x8x128xf32> to vector<8x128xf32>
    %49 = arith.subf %35, %48 : vector<8x128xf32>
    %50 = vector.extract_strided_slice %24 {offsets = [1, 0, 0], sizes = [1, 8, 128], strides = [1, 1, 1]} : vector<2x8x128xf32> to vector<1x8x128xf32>
    %51 = vector.shape_cast %50 : vector<1x8x128xf32> to vector<8x128xf32>
    %52 = arith.mulf %51, %49 : vector<8x128xf32>
    %53 = vector.shape_cast %52 : vector<8x128xf32> to vector<1x8x128xf32>
    %cst_18 = arith.constant dense<0.000000e+00> : vector<1xf32>
    %54 = vector.multi_reduction <add>, %53, %cst_18 [1, 2] : vector<1x8x128xf32> to vector<1xf32>
    %55 = vector.shape_cast %54 : vector<1xf32> to vector<1x1x1xf32>
    %56 = vector.extract %55[0, 0, 0] : f32 from vector<1x1x1xf32>
    %57 = arith.subf %46, %56 : f32
    %c0_19 = arith.constant 0 : index
    %c0_20 = arith.constant 0 : index
    %58 = vector.load %arg7[%c0_19, %c0_20] : memref<1x1xf32, #tpu.memory_space<vmem>>, vector<1x1xf32>
    %59 = vector.broadcast %57 : f32 to vector<1x1xf32>
    %60 = arith.addf %58, %59 : vector<1x1xf32>
    %c0_21 = arith.constant 0 : index
    %c0_22 = arith.constant 0 : index
    %61 = vector.load %arg7[%c0_21, %c0_22] : memref<1x1xf32, #tpu.memory_space<vmem>>, vector<1x1xf32>
    tpu.vector_store %arg7[%c0_21, %c0_22], %60 {strides = array<i32>} : memref<1x1xf32, #tpu.memory_space<vmem>>, vector<1x1xf32>,
    %c0_23 = arith.constant 0 : index
    %c0_24 = arith.constant 0 : index
    %62 = vector.load %arg8[%c0_23, %c0_24] : memref<1x128xf32, #tpu.memory_space<vmem>>, vector<1x128xf32>
    %cst_25 = arith.constant dense<0.000000e+00> : vector<8x128xf32>
    %63 = vector.multi_reduction <add>, %7, %cst_25 [0] : vector<2x8x128xf32> to vector<8x128xf32>
    %cst_26 = arith.constant dense<0.000000e+00> : vector<128xf32>
    %64 = vector.multi_reduction <add>, %63, %cst_26 [0] : vector<8x128xf32> to vector<128xf32>
    %65 = vector.shape_cast %64 : vector<128xf32> to vector<1x128xf32>
    %66 = arith.addf %62, %65 : vector<1x128xf32>
    %c0_27 = arith.constant 0 : index
    %c0_28 = arith.constant 0 : index
    %67 = vector.load %arg8[%c0_27, %c0_28] : memref<1x128xf32, #tpu.memory_space<vmem>>, vector<1x128xf32>
    tpu.vector_store %arg8[%c0_27, %c0_28], %66 {strides = array<i32>} : memref<1x128xf32, #tpu.memory_space<vmem>>, vector<1x128xf32>,
    %c0_i32_29 = arith.constant 0 : i32
    %68 = arith.cmpi eq, %arg0, %c0_i32_29 : i32
    %69 = arith.extui %68 : i1 to i32
    %c0_i32_30 = arith.constant 0 : i32
    %70 = arith.cmpi ne, %69, %c0_i32_30 : i32
    scf.if %70 {
      %c0_31 = arith.constant 0 : index
      %c0_32 = arith.constant 0 : index
      %71 = vector.load %arg7[%c0_31, %c0_32] : memref<1x1xf32, #tpu.memory_space<vmem>>, vector<1x1xf32>
      %cst_33 = arith.constant 0.020833334 : f32
      %72 = vector.broadcast %cst_33 : f32 to vector<1x1xf32>
      %73 = arith.mulf %71, %72 : vector<1x1xf32>
      %c0_34 = arith.constant 0 : index
      %c0_35 = arith.constant 0 : index
      %74 = vector.load %arg5[%c0_34, %c0_35] : memref<1x1xf32, #tpu.memory_space<vmem>>, vector<1x1xf32>
      tpu.vector_store %arg5[%c0_34, %c0_35], %73 {strides = array<i32>} : memref<1x1xf32, #tpu.memory_space<vmem>>, vector<1x1xf32>,
      %c0_36 = arith.constant 0 : index
      %c0_37 = arith.constant 0 : index
      %75 = vector.load %arg8[%c0_36, %c0_37] : memref<1x128xf32, #tpu.memory_space<vmem>>, vector<1x128xf32>
      %cst_38 = arith.constant 6.250000e-02 : f32
      %76 = vector.broadcast %cst_38 : f32 to vector<1x128xf32>
      %77 = arith.mulf %75, %76 : vector<1x128xf32>
      %cst_39 = arith.constant 0.899999976 : f32
      %78 = vector.broadcast %cst_39 : f32 to vector<1x128xf32>
      %79 = arith.mulf %8, %78 : vector<1x128xf32>
      %cst_40 = arith.constant 1.000000e-01 : f32
      %80 = vector.broadcast %cst_40 : f32 to vector<1x128xf32>
      %81 = arith.mulf %77, %80 : vector<1x128xf32>
      %82 = arith.addf %79, %81 : vector<1x128xf32>
      %c0_41 = arith.constant 0 : index
      %c0_42 = arith.constant 0 : index
      %83 = vector.load %arg6[%c0_41, %c0_42] : memref<1x128xf32, #tpu.memory_space<vmem>>, vector<1x128xf32>
      tpu.vector_store %arg6[%c0_41, %c0_42], %82 {strides = array<i32>} : memref<1x128xf32, #tpu.memory_space<vmem>>, vector<1x128xf32>,
    } else {
    }
    return
  }
  func.func @transform_0(%arg0: i32) -> (i32, i32) {
    %c0_i32 = arith.constant 0 : i32
    %c0_i32_0 = arith.constant 0 : i32
    %c0_i32_1 = arith.constant 0 : i32
    return %c0_i32, %c0_i32_0 : i32, i32
  }
  func.func @transform_1(%arg0: i32) -> (i32, i32, i32) {
    %c0_i32 = arith.constant 0 : i32
    %c0_i32_0 = arith.constant 0 : i32
    %c0_i32_1 = arith.constant 0 : i32
    return %c0_i32, %arg0, %c0_i32_0 : i32, i32, i32
  }
  func.func @transform_2(%arg0: i32) -> (i32, i32, i32) {
    %c0_i32 = arith.constant 0 : i32
    %c0_i32_0 = arith.constant 0 : i32
    %c0_i32_1 = arith.constant 0 : i32
    return %c0_i32, %arg0, %c0_i32_0 : i32, i32, i32
  }
  func.func @transform_3(%arg0: i32) -> (i32, i32) {
    %c0_i32 = arith.constant 0 : i32
    %c0_i32_0 = arith.constant 0 : i32
    %c0_i32_1 = arith.constant 0 : i32
    return %c0_i32, %c0_i32_0 : i32, i32
  }
  func.func @transform_4(%arg0: i32) -> (i32, i32) {
    %c0_i32 = arith.constant 0 : i32
    %c0_i32_0 = arith.constant 0 : i32
    %c0_i32_1 = arith.constant 0 : i32
    return %c0_i32, %c0_i32_0 : i32, i32
  }
  func.func @transform_5(%arg0: i32) -> (i32, i32) {
    %c0_i32 = arith.constant 0 : i32
    %c0_i32_0 = arith.constant 0 : i32
    %c0_i32_1 = arith.constant 0 : i32
    return %c0_i32, %c0_i32_0 : i32, i32
  }
}

</mosaic_0001>

<llo_original>
// kernel: tpu_custom_call.1
$region0: #{tpu_custom_call.1}
  #allocation0 [shape = 'u32[]', space=smem, size = 0x4, offset = 0x4, fixed_abs, tag = 'smem constant byte address 0x4 - core index']
  #allocation1 [shape = 'u32[144,128]{1,0:T(1,128)}', space=vmem, size = 0x12000, scoped, tag = 'internal scratch']
  #allocation2 [shape = 'f32[1,1]{1,0:T(1,128)}', space=vmem, size = 0x200, scoped, tag = 'scratch operand']
  #allocation3 [shape = 'f32[1,128]{1,0:T(1,128)}', space=vmem, size = 0x200, scoped, tag = 'scratch operand']
  #allocation4 [shape = 'f32[1,1]{1,0:T(1,128)S(6)}', space=smem, size = 0x200, scoped, tag = 'scoped memory for tpu_custom_call.1']
  %s0 = inlined_call_operand.<no memory space> [shape: f32[1,1], index: 0, kind: input, shape index: {}]
  %s1 = inlined_call_operand.hbm [shape: f32[4,8,128], index: 1, kind: input, shape index: {}]
  %s2 = inlined_call_operand.hbm [shape: f32[2,8,128], index: 2, kind: input, shape index: {}]
  %s3 = inlined_call_operand.vmem [shape: f32[1,128], index: 3, kind: input, shape index: {}]
  %s4 = inlined_call_operand.hbm [shape: f32[1,1], index: 4, kind: output, shape index: {0}]
  %s5 = inlined_call_operand.hbm [shape: f32[1,128], index: 5, kind: output, shape index: {1}]
  %6 = xla_tuple %s4, %s5
  %s7 = sld [smem:[#allocation0]]
  $region50: #{tpu_custom_call.1} parent=0
    _
  %s9 = ssub.s32 1, %s7
  %s10 = scalar_select 0, %s9, %s7
  %11 = sst [smem:[#allocation4]] %s0
  $region1: #{tpu_custom_call.1} parent=0
    #allocation5 [shape = 'u8[16384]{0}', space=vmem, size = 0x4000, scoped, tag = 'input window, operand 1, single buffered']
    #allocation6 [shape = 's32[1]{0}', space=sflag, size = 0x4, scoped, tag = 'scoped memory for tpu_custom_call.1']
    #allocation7 [shape = 's32[1]{0}', space=sflag, size = 0x4, scoped, tag = 'scoped memory for tpu_custom_call.1']
    #allocation8 [shape = 'u8[8192]{0}', space=vmem, size = 0x2000, scoped, tag = 'input window, operand 2, single buffered']
    #allocation9 [shape = 's32[1]{0}', space=sflag, size = 0x4, scoped, tag = 'scoped memory for tpu_custom_call.1']
    #allocation10 [shape = 'u8[512]{0}', space=vmem, size = 0x400, scoped, tag = 'output window, operand 0, single buffered']
    #allocation11 [shape = 'u8[512]{0}', space=vmem, size = 0x400, scoped, tag = 'output window, operand 1, single buffered']
    #allocation12 [shape = 's32[1]{0}', space=sflag, size = 0x4, scoped, tag = 'scoped memory for tpu_custom_call.1']
    %12 = vsyncpa [#allocation6], 0
    %13 = vsyncpa [#allocation9], 0
    %14 = vsyncpa [#allocation7], 0
    %15 = vsyncpa [#allocation12], 0
    // Predicated region
    $region2: #{tpu_custom_call.1} parent=1 // pred_check
      _
    $region3: #{tpu_custom_call.1} parent=1 // pred_check_branch
      %17 = sbr.rel (0) target = $region5
    $region4: #{tpu_custom_call.1} parent=1 // pred_region
      _
    $region5: #{tpu_custom_call.1} parent=1 // pred_fallthru
      _
    // Predicated region
    $region6: #{tpu_custom_call.1} parent=1 // pred_check
      _
    $region7: #{tpu_custom_call.1} parent=1 // pred_check_branch
      %19 = sbr.rel (0) target = $region9
    $region8: #{tpu_custom_call.1} parent=1 // pred_region
      %s21 = ssub.s32 512, 512
      %22 = vsyncadd [#allocation6], %s21
      %s23 = sshll.u32 [#allocation5], 4
      %s24 = int_to_ptr.vmem [resolvable:$true] %s23
      %29 = dma.hbm_to_vmem [thread:$0]  %s1, 512, %s24, [#allocation6], 128, 128, 8
    $region9: #{tpu_custom_call.1} parent=1 // pred_fallthru
      _
    // Predicated region
    $region10: #{tpu_custom_call.1} parent=1 // pred_check
      _
    $region11: #{tpu_custom_call.1} parent=1 // pred_check_branch
      %31 = sbr.rel (0) target = $region13
    $region12: #{tpu_custom_call.1} parent=1 // pred_region
      %s33 = ssub.s32 256, 256
      %34 = vsyncadd [#allocation9], %s33
      %s35 = sshll.u32 [#allocation8], 4
      %s36 = int_to_ptr.vmem [resolvable:$true] %s35
      %41 = dma.hbm_to_vmem [thread:$0]  %s2, 256, %s36, [#allocation9], 128, 128, 8
    $region13: #{tpu_custom_call.1} parent=1 // pred_fallthru
      _
    // Predicated region
    $region14: #{tpu_custom_call.1} parent=1 // pred_check
      _
    $region15: #{tpu_custom_call.1} parent=1 // pred_check_branch
      %43 = sbr.rel (0) target = $region17
    $region16: #{tpu_custom_call.1} parent=1 // pred_region
      _
    $region17: #{tpu_custom_call.1} parent=1 // pred_fallthru
      _
    // Predicated region
    $region18: #{tpu_custom_call.1} parent=1 // pred_check
      _
    $region19: #{tpu_custom_call.1} parent=1 // pred_check_branch
      %45 = sbr.rel (0) target = $region21
    $region20: #{tpu_custom_call.1} parent=1 // pred_region
      %46 = dma.done [#allocation6], 512
    $region21: #{tpu_custom_call.1} parent=1 // pred_fallthru
      _
    // Predicated region
    $region22: #{tpu_custom_call.1} parent=1 // pred_check
      _
    $region23: #{tpu_custom_call.1} parent=1 // pred_check_branch
      %48 = sbr.rel (0) target = $region25
    $region24: #{tpu_custom_call.1} parent=1 // pred_region
      %49 = dma.done [#allocation9], 256
    $region25: #{tpu_custom_call.1} parent=1 // pred_fallthru
      _
    %p50 = scmp.eq.s32.totalorder 0, 0
    // Predicated region
    $region26: #{tpu_custom_call.1} parent=1 // pred_check
      %p51 = pneg %p50
    $region27: #{tpu_custom_call.1} parent=1 // pred_check_branch
      %53 = sbr.rel (%p51) target = $region29
    $region28: #{tpu_custom_call.1} parent=1 // pred_region
      %vm54 = vcmask 0
      %55 = vst.msk [vmem:[#allocation2] sm:$0x1] %vm54, 0.0
      %56 = vst [vmem:[#allocation3] sm:$0x1] 0.0
    $region29: #{tpu_custom_call.1} parent=1 // pred_fallthru
      _
    %s57 = sld [smem:[#allocation4]]
    %v58 = vld [vmem:[#allocation5] sm:$0xff]
    %v59 = vld [vmem:[#allocation5 + $0x8] sm:$0xff]
    %v60 = vld [vmem:[#allocation5 + $0x10] sm:$0xff]
    %v61 = vld [vmem:[#allocation5 + $0x18] sm:$0xff]
    %v62 = vmul.f32 %v58, 10.0
    %v63 = vmul.f32 %v59, 10.0
    %v64 = vmul.f32 %v60, 10.0
    %v65 = vmul.f32 %v61, 10.0
    %v66 = vld [vmem:[#allocation8] sm:$0xff]
    %v67 = vld [vmem:[#allocation8 + $0x8] sm:$0xff]
    %v68 = vld [vmem:[%s3] sm:$0x1]
    %v70 = vlaneseq
    %v71 = vshrl.u32 %v70, 7
    %v72 = vsub.s32 0, %v71
    %v73 = vrot.slane %v68, %v72
    %v75 = vsub.f32 %v66, %v73
    %v76 = vsub.f32 %v67, %v73
    %v77 = vstv %s57
    %v78 = vmul.f32 %v75, %v77
    %v79 = vmul.f32 %v76, %v77
    %80 = vmax.xlane.f32.xlu0 %v78
    %v81 = vpop.xlane.xlu0 %80
    %82 = vmax.xlane.f32.xlu0 %v79
    %v83 = vpop.xlane.xlu0 %82
    %v84 = vsub.f32 %v78, %v81
    %v85 = vsub.f32 %v79, %v83
    %v86 = vmul.f32 %v84, 1.442695
    %v87 = vpow.pop %v86
    %v88 = vmul.f32 %v85, 1.442695
    %v89 = vpow.pop %v88
    %90 = vadd.xlane.f32.xlu0 %v87
    %v91 = vpop.xlane.xlu0 %90
    %92 = vadd.xlane.f32.xlu0 %v89
    %v93 = vpop.xlane.xlu0 %92
    %v94 = vrcp.pop %v91
    %v95 = vmul.f32 1.0, %v94
    %v96 = vrcp.pop %v93
    %v97 = vmul.f32 1.0, %v96
    %v98 = vmul.f32 %v87, %v95
    %v99 = vmul.f32 %v89, %v97
    %100 = vmax.xlane.f32.xlu0 %v62
    %v101 = vpop.xlane.xlu0 %100
    %102 = vmax.xlane.f32.xlu0 %v63
    %v103 = vpop.xlane.xlu0 %102
    %104 = vmax.xlane.f32.xlu0 %v64
    %v105 = vpop.xlane.xlu0 %104
    %106 = vmax.xlane.f32.xlu0 %v65
    %v107 = vpop.xlane.xlu0 %106
    %v108 = vsub.f32 %v62, %v101
    %v109 = vsub.f32 %v63, %v103
    %v110 = vsub.f32 %v64, %v105
    %v111 = vsub.f32 %v65, %v107
    %v112 = vmul.f32 %v108, 1.442695
    %v113 = vpow.pop %v112
    %v114 = vmul.f32 %v109, 1.442695
    %v115 = vpow.pop %v114
    %v116 = vmul.f32 %v110, 1.442695
    %v117 = vpow.pop %v116
    %v118 = vmul.f32 %v111, 1.442695
    %v119 = vpow.pop %v118
    %120 = vadd.xlane.f32.xlu0 %v113
    %v121 = vpop.xlane.xlu0 %120
    %122 = vadd.xlane.f32.xlu0 %v115
    %v123 = vpop.xlane.xlu0 %122
    %124 = vadd.xlane.f32.xlu0 %v117
    %v125 = vpop.xlane.xlu0 %124
    %126 = vadd.xlane.f32.xlu0 %v119
    %v127 = vpop.xlane.xlu0 %126
    %v128 = vlog2.pop %v121
    %v129 = vmul.f32 %v128, 0.6931472
    %v130 = vlog2.pop %v123
    %v131 = vmul.f32 %v130, 0.6931472
    %v132 = vlog2.pop %v125
    %v133 = vmul.f32 %v132, 0.6931472
    %v134 = vlog2.pop %v127
    %v135 = vmul.f32 %v134, 0.6931472
    %v136 = vsub.f32 %v108, %v129
    %v137 = vsub.f32 %v109, %v131
    %v138 = vsub.f32 %v110, %v133
    %v139 = vsub.f32 %v111, %v135
    %v140 = vadd.f32 %v136, %v137
    %v141 = vadd.f32 %v140, %v138
    %v142 = vadd.f32 %v141, %v139
    %v143 = vsub.f32 %v142, %v136
    %v144 = vmul.f32 %v98, %v143
    %145 = vadd.xlane.f32.xlu0 %v144
    %v146 = vpop.xlane.xlu0 %145
    %v147 = vrot.slane %v146, 4
    %v148 = vadd.f32 %v146, %v147
    %v149 = vrot.slane %v148, 2
    %v150 = vadd.f32 %v148, %v149
    %v151 = vrot.slane %v150, 1
    %v152 = vadd.f32 %v150, %v151
    %s153 = vtos %v152
    %s154 = ssub.f32 0.0, %s153
    %v155 = vsub.f32 %v142, %v137
    %v156 = vmul.f32 %v99, %v155
    %157 = vadd.xlane.f32.xlu0 %v156
    %v158 = vpop.xlane.xlu0 %157
    %v159 = vrot.slane %v158, 4
    %v160 = vadd.f32 %v158, %v159
    %v161 = vrot.slane %v160, 2
    %v162 = vadd.f32 %v160, %v161
    %v163 = vrot.slane %v162, 1
    %v164 = vadd.f32 %v162, %v163
    %s165 = vtos %v164
    %s166 = ssub.f32 %s154, %s165
    %v167 = vld [vmem:[#allocation2] sm:$0x1]
    %v168 = vstv %s166
    %v169 = vadd.f32 %v167, %v168
    %vm170 = vcmask 0
    %171 = vst.msk [vmem:[#allocation2] sm:$0x1] %vm170, %v169
    %v172 = vld [vmem:[#allocation3] sm:$0x1]
    %v173 = vadd.f32 %v66, %v67
    %v174 = vrot.slane %v173, 4
    %v175 = vadd.f32 %v173, %v174
    %v176 = vrot.slane %v175, 2
    %v177 = vadd.f32 %v175, %v176
    %v178 = vrot.slane %v177, 1
    %v179 = vadd.f32 %v177, %v178
    %v180 = vadd.f32 %v172, %v179
    %181 = vst [vmem:[#allocation3] sm:$0x1] %v180
    // Predicated region
    $region30: #{tpu_custom_call.1} parent=1 // pred_check
      %p182 = pneg %p50
    $region31: #{tpu_custom_call.1} parent=1 // pred_check_branch
      %184 = sbr.rel (%p182) target = $region33
    $region32: #{tpu_custom_call.1} parent=1 // pred_region
      %v185 = vld [vmem:[#allocation2] sm:$0x1]
      %v186 = vmul.f32 %v185, 0.020833334
      %187 = vst.msk [vmem:[#allocation10] sm:$0x1] %vm170, %v186
      %v188 = vld [vmem:[#allocation3] sm:$0x1]
      %v189 = vmul.f32 %v188, 0.0625
      %v190 = vmul.f32 %v68, 0.9
      %v191 = vmul.f32 %v189, 0.1
      %v192 = vadd.f32 %v190, %v191
      %193 = vst [vmem:[#allocation11] sm:$0x1] %v192
    $region33: #{tpu_custom_call.1} parent=1 // pred_fallthru
      _
    // Predicated region
    $region34: #{tpu_custom_call.1} parent=1 // pred_check
      _
    $region35: #{tpu_custom_call.1} parent=1 // pred_check_branch
      %195 = sbr.rel (0) target = $region37
    $region36: #{tpu_custom_call.1} parent=1 // pred_region
      %s197 = ssub.s32 16, 16
      %198 = vsyncadd [#allocation7], %s197
      %s200 = sshll.u32 [#allocation10], 4
      %s201 = int_to_ptr.vmem [resolvable:$true] %s200
      %203 = dma.vmem_to_hbm [thread:$0]  %s201, 16, %s4, [#allocation7]
    $region37: #{tpu_custom_call.1} parent=1 // pred_fallthru
      _
    // Predicated region
    $region38: #{tpu_custom_call.1} parent=1 // pred_check
      _
    $region39: #{tpu_custom_call.1} parent=1 // pred_check_branch
      %205 = sbr.rel (0) target = $region41
    $region40: #{tpu_custom_call.1} parent=1 // pred_region
      %s207 = ssub.s32 16, 16
      %208 = vsyncadd [#allocation12], %s207
      %s210 = sshll.u32 [#allocation11], 4
      %s211 = int_to_ptr.vmem [resolvable:$true] %s210
      %213 = dma.vmem_to_hbm [thread:$0]  %s211, 16, %s5, [#allocation12]
    $region41: #{tpu_custom_call.1} parent=1 // pred_fallthru
      _
    // Predicated region
    $region42: #{tpu_custom_call.1} parent=1 // pred_check
      _
    $region43: #{tpu_custom_call.1} parent=1 // pred_check_branch
      %215 = sbr.rel (0) target = $region45
    $region44: #{tpu_custom_call.1} parent=1 // pred_region
      %216 = dma.done [#allocation7], 16
    $region45: #{tpu_custom_call.1} parent=1 // pred_fallthru
      _
    // Predicated region
    $region46: #{tpu_custom_call.1} parent=1 // pred_check
      _
    $region47: #{tpu_custom_call.1} parent=1 // pred_check_branch
      %218 = sbr.rel (0) target = $region49
    $region48: #{tpu_custom_call.1} parent=1 // pred_region
      %219 = dma.done [#allocation12], 16
    $region49: #{tpu_custom_call.1} parent=1 // pred_fallthru
      _
    %220 = vsyncpa [#allocation6], 1
    %221 = vsyncpa [#allocation9], 1
    %222 = vsyncpa [#allocation7], 1
    %223 = vsyncpa [#allocation12], 1

</llo_original>
